<compile_context>
chip_gen: v5e
topology: v5e:2x2
jax: 0.10.0
libtpu: 0.0.40
codegen_flags: <defaults>
</compile_context>

<pallas_src>
import jax
import jax.numpy as jnp
from jax.experimental import pallas as pl
from jax.experimental.pallas import tpu as pltpu


def gat_kernel(idx_ref, adj_ref, emb_ref, w_ref, out_ref, wh_ref, whq_ref, adjq_ref):
    """Single grid step: toy-sized graph resident in VMEM; query ids in SMEM."""
    emb = emb_ref[...]                                    # (N, F_in)
    W = w_ref[...]                                        # (F_in, Dp) zero-padded lane-dense

    # Wh = embedding @ W for ALL nodes (needed as keys/values of every query row).  (MXU)
    Wh = jnp.dot(emb, W, preferred_element_type=jnp.float32)               # (N, Dp)
    wh_ref[...] = Wh                                      # scratch copy for row gather

    # Gather the B query rows of Wh and of the adjacency:
    # SMEM scalar indices -> dynamic VMEM sublane reads (no one-hot, no extra MXU pass).
    Bp = whq_ref.shape[0]
    for b in range(Bp):                                   # Bp small & static -> unrolled
        i = idx_ref[b]
        whq_ref[pl.ds(b, 1), :] = wh_ref[pl.ds(i, 1), :]
        adjq_ref[pl.ds(b, 1), :] = adj_ref[pl.ds(i, 1), :]

    Wh_q = whq_ref[...]                                                    # (Bp, Dp)
    adj_q = adjq_ref[...]                                                  # (Bp, N)

    # similarity rows = Wh_q @ Wh^T without materializing a transpose.
    sim = jax.lax.dot_general(
        Wh_q, Wh, (((1,), (1,)), ((), ())),
        preferred_element_type=jnp.float32)                                # (Bp, N)

    # query-aware alpha_i = Wh[i] . mean_{j : adj[i,j] != 0} Wh[j]
    neigh_f = (adj_q != 0.0).astype(jnp.float32)                           # (Bp, N)
    neigh_sum = jnp.dot(neigh_f, Wh, preferred_element_type=jnp.float32)   # (Bp, Dp)
    count = jnp.sum(neigh_f, axis=1, keepdims=True)                        # (Bp, 1)
    rowdot = jnp.sum(Wh_q * neigh_sum, axis=1, keepdims=True)              # (Bp, 1)
    # TODO(synk): isolated nodes (count == 0) yield NaN, matching the PyTorch module.
    alpha = rowdot * pl.reciprocal(count, approx=False)                    # (Bp, 1)
    e = sim + alpha                                                        # per-row broadcast

    # masked softmax over dim=1 (attention mask is `adj > 0`, as in the module).
    att_mask = adj_q > 0.0
    att = jnp.where(att_mask, e, -9000000000000000.0)
    att = jnp.exp(att - jnp.max(att, axis=1, keepdims=True))
    att = att * pl.reciprocal(jnp.sum(att, axis=1, keepdims=True), approx=False)
    # TODO(synk): F.dropout on attention skipped (eval-mode identity; stochastic op).

    # h_prime rows = attention @ Wh ; concat=True -> ELU(alpha=1).
    h_prime = jnp.dot(att, Wh, preferred_element_type=jnp.float32)         # (Bp, Dp)
    # exp only on the clamped (non-positive) branch: no overflow, == elu negative branch.
    h = jnp.where(h_prime > 0.0, h_prime,
                  jnp.exp(jnp.minimum(h_prime, 0.0)) - 1.0)

    # F.normalize: x / max(||x||_2, 1e-12) along the feature dim; one lane-dense store.
    norm = jnp.sqrt(jnp.sum(h * h, axis=1, keepdims=True))
    out_ref[...] = h * pl.reciprocal(jnp.maximum(norm, 1e-12), approx=False)


def gat_forward(x_idx, adj, embedding, W):
    """x_idx: (B,) int32 node ids; adj: (N,N) dense adjacency (== edge_index.to_dense());
    embedding: (N, F_in); W: (F_in, D). Returns (B, D) float32."""
    B = x_idx.shape[0]
    N = adj.shape[0]
    F_in, D = W.shape

    # Lane-dense feature width: pad D up to a multiple of 128 with zero columns
    # (transparent to every op downstream: matmuls, ELU, norm).
    Dp = pl.cdiv(D, 128) * 128
    # Sublane-dense query count: pad B up to a multiple of 8 (padding rows use node 0
    # and are sliced off below).
    Bp = pl.cdiv(B, 8) * 8

    W_pad = jnp.pad(W.astype(jnp.float32), ((0, 0), (0, Dp - D)))
    idx_pad = jnp.pad(x_idx.astype(jnp.int32), (0, Bp - B))

    flops = 2 * (N * F_in * Dp + 3 * Bp * N * Dp) + 10 * Bp * N
    transcendentals = Bp * N + Bp * Dp + 4 * Bp
    bytes_accessed = 4 * (N * N + N * F_in + F_in * Dp + Bp * Dp + Bp)

    out_pad = pl.pallas_call(
        gat_kernel,
        out_shape=jax.ShapeDtypeStruct((Bp, Dp), jnp.float32),
        grid_spec=pltpu.PrefetchScalarGridSpec(
            num_scalar_prefetch=1,                     # x_idx -> SMEM
            grid=(1,),
            in_specs=[
                pl.BlockSpec((N, N), lambda i, idx: (0, 0)),       # adj
                pl.BlockSpec((N, F_in), lambda i, idx: (0, 0)),    # embedding
                pl.BlockSpec((F_in, Dp), lambda i, idx: (0, 0)),   # W (padded)
            ],
            out_specs=pl.BlockSpec((Bp, Dp), lambda i, idx: (0, 0)),
            scratch_shapes=[
                pltpu.VMEM((N, Dp), jnp.float32),    # Wh (all nodes), for row gather
                pltpu.VMEM((Bp, Dp), jnp.float32),   # gathered query rows of Wh
                pltpu.VMEM((Bp, N), jnp.float32),    # gathered query rows of adjacency
            ],
        ),
        compiler_params=pltpu.CompilerParams(dimension_semantics=("arbitrary",)),
        cost_estimate=pl.CostEstimate(
            flops=flops, transcendentals=transcendentals, bytes_accessed=bytes_accessed),
    )(idx_pad, adj.astype(jnp.float32), embedding.astype(jnp.float32), W_pad)

    return out_pad[:B, :D]


def _reference(x_idx, adj, embedding, W):
    """Pure-JAX reference mirroring the PyTorch forward (eval mode)."""
    Wh = embedding @ W
    sim = Wh @ Wh.T
    mask = (adj != 0.0).astype(jnp.float32)
    neigh_sum = mask @ Wh
    count = jnp.sum(mask, axis=1, keepdims=True)
    alpha = jnp.sum(Wh * neigh_sum, axis=1, keepdims=True) / count
    e = sim + alpha
    att = jnp.where(adj > 0.0, e, -9000000000000000.0)
    att = jax.nn.softmax(att, axis=1)
    h = jax.nn.elu(att @ Wh)
    g = h[x_idx]
    norm = jnp.sqrt(jnp.sum(g * g, axis=1, keepdims=True))
    return g / jnp.maximum(norm, 1e-12)


if __name__ == "__main__":
    # Small shapes consistent with the module.
    N = 16            # number of graph nodes
    F_IN = 32         # num_embeddings (input feature dim)
    D = 32            # out_channels
    B = 8             # number of query node indices in x

    key = jax.random.PRNGKey(0)
    k_w, k_emb, k_x = jax.random.split(key, 3)

    # Deterministic xavier_uniform_(gain=1.414) for W; `a` is unused in this forward path.
    gain = 1.414
    bound_w = gain * jnp.sqrt(6.0 / (F_IN + D))
    W = jax.random.uniform(k_w, (F_IN, D), jnp.float32, -bound_w, bound_w)

    embedding = jax.random.normal(k_emb, (N, F_IN), jnp.float32)

    # Dense adjacency (equivalent of torch.sparse_coo_tensor(*edge).to_dense()):
    # ring graph with self-loops so every row has >= 1 neighbor.
    ii = jnp.arange(N)
    adj = (
        jnp.zeros((N, N), jnp.float32)
        .at[ii, ii].set(1.0)
        .at[ii, (ii + 1) % N].set(1.0)
        .at[ii, (ii - 1) % N].set(1.0)
    )

    x_idx = jax.random.randint(k_x, (B,), 0, N, dtype=jnp.int32)

    out = jax.block_until_ready(gat_forward(x_idx, adj, embedding, W))
    ref = _reference(x_idx, adj, embedding, W)

    assert out.shape == (B, D)
    assert jnp.allclose(out, ref, atol=1e-5, rtol=1e-5), "mismatch vs JAX reference"

    print("KERNEL_OK")
</pallas_src>

<mosaic_0001>
module attributes {stable_mosaic.version = 11 : i64} {
  func.func @gat_kernel(%arg0: i32, %arg1: memref<8xi32, #tpu.memory_space<smem>>, %arg2: memref<16x16xf32, #tpu.memory_space<vmem>>, %arg3: memref<16x32xf32, #tpu.memory_space<vmem>>, %arg4: memref<32x128xf32, #tpu.memory_space<vmem>>, %arg5: memref<8x128xf32, #tpu.memory_space<vmem>>, %arg6: memref<16x128xf32, #tpu.memory_space<vmem>>, %arg7: memref<8x128xf32, #tpu.memory_space<vmem>>, %arg8: memref<8x16xf32, #tpu.memory_space<vmem>>) attributes {dimension_semantics = [#tpu.dimension_semantics<arbitrary>], iteration_bounds = array<i64: 1>, scalar_prefetch = 1 : i64, scratch_operands = 3 : i64, tpu.core_type = #tpu.core_type<tc>, window_params = [{pipeline_mode = #tpu.pipeline_mode<synchronous>, transform_indices = @transform_0, window_bounds = array<i64: 16, 16>}, {pipeline_mode = #tpu.pipeline_mode<synchronous>, transform_indices = @transform_1, window_bounds = array<i64: 16, 32>}, {pipeline_mode = #tpu.pipeline_mode<synchronous>, transform_indices = @transform_2, window_bounds = array<i64: 32, 128>}, {pipeline_mode = #tpu.pipeline_mode<synchronous>, transform_indices = @transform_3, window_bounds = array<i64: 8, 128>}]} {
    %c0 = arith.constant 0 : index
    %c0_0 = arith.constant 0 : index
    %0 = vector.load %arg3[%c0, %c0_0] : memref<16x32xf32, #tpu.memory_space<vmem>>, vector<16x32xf32>
    %c0_1 = arith.constant 0 : index
    %c0_2 = arith.constant 0 : index
    %1 = vector.load %arg4[%c0_1, %c0_2] : memref<32x128xf32, #tpu.memory_space<vmem>>, vector<32x128xf32>
    %cst = arith.constant dense<0.000000e+00> : vector<16x128xf32>
    %2 = tpu.matmul %0, %1, %cst {dimension_numbers = #tpu.dot_dimension_numbers<[1], [0], [0], [1], [0, 0, 1, 1], [], []>} : vector<16x32xf32>, vector<32x128xf32>, vector<16x128xf32> -> vector<16x128xf32>
    %c0_3 = arith.constant 0 : index
    %c0_4 = arith.constant 0 : index
    %3 = vector.load %arg6[%c0_3, %c0_4] : memref<16x128xf32, #tpu.memory_space<vmem>>, vector<16x128xf32>
    tpu.vector_store %arg6[%c0_3, %c0_4], %2 {strides = array<i32>} : memref<16x128xf32, #tpu.memory_space<vmem>>, vector<16x128xf32>,
    %c0_5 = arith.constant 0 : index
    %4 = memref.load %arg1[%c0_5] : memref<8xi32, #tpu.memory_space<smem>>
    %5 = arith.index_cast %4 : i32 to index
    %c0_6 = arith.constant 0 : index
    %6 = vector.load %arg6[%5, %c0_6] : memref<16x128xf32, #tpu.memory_space<vmem>>, vector<1x128xf32>
    %c0_7 = arith.constant 0 : index
    %c0_8 = arith.constant 0 : index
    %7 = vector.load %arg7[%c0_7, %c0_8] : memref<8x128xf32, #tpu.memory_space<vmem>>, vector<1x128xf32>
    tpu.vector_store %arg7[%c0_7, %c0_8], %6 {strides = array<i32>} : memref<8x128xf32, #tpu.memory_space<vmem>>, vector<1x128xf32>,
    %8 = arith.index_cast %4 : i32 to index
    %c0_9 = arith.constant 0 : index
    %9 = vector.load %arg2[%8, %c0_9] : memref<16x16xf32, #tpu.memory_space<vmem>>, vector<1x16xf32>
    %c0_10 = arith.constant 0 : index
    %c0_11 = arith.constant 0 : index
    %10 = vector.load %arg8[%c0_10, %c0_11] : memref<8x16xf32, #tpu.memory_space<vmem>>, vector<1x16xf32>
    tpu.vector_store %arg8[%c0_10, %c0_11], %9 {strides = array<i32>} : memref<8x16xf32, #tpu.memory_space<vmem>>, vector<1x16xf32>,
    %c1 = arith.constant 1 : index
    %11 = memref.load %arg1[%c1] : memref<8xi32, #tpu.memory_space<smem>>
    %12 = arith.index_cast %11 : i32 to index
    %c0_12 = arith.constant 0 : index
    %13 = vector.load %arg6[%12, %c0_12] : memref<16x128xf32, #tpu.memory_space<vmem>>, vector<1x128xf32>
    %c1_13 = arith.constant 1 : index
    %c0_14 = arith.constant 0 : index
    %14 = vector.load %arg7[%c1_13, %c0_14] : memref<8x128xf32, #tpu.memory_space<vmem>>, vector<1x128xf32>
    tpu.vector_store %arg7[%c1_13, %c0_14], %13 {strides = array<i32>} : memref<8x128xf32, #tpu.memory_space<vmem>>, vector<1x128xf32>,
    %15 = arith.index_cast %11 : i32 to index
    %c0_15 = arith.constant 0 : index
    %16 = vector.load %arg2[%15, %c0_15] : memref<16x16xf32, #tpu.memory_space<vmem>>, vector<1x16xf32>
    %c1_16 = arith.constant 1 : index
    %c0_17 = arith.constant 0 : index
    %17 = vector.load %arg8[%c1_16, %c0_17] : memref<8x16xf32, #tpu.memory_space<vmem>>, vector<1x16xf32>
    tpu.vector_store %arg8[%c1_16, %c0_17], %16 {strides = array<i32>} : memref<8x16xf32, #tpu.memory_space<vmem>>, vector<1x16xf32>,
    %c2 = arith.constant 2 : index
    %18 = memref.load %arg1[%c2] : memref<8xi32, #tpu.memory_space<smem>>
    %19 = arith.index_cast %18 : i32 to index
    %c0_18 = arith.constant 0 : index
    %20 = vector.load %arg6[%19, %c0_18] : memref<16x128xf32, #tpu.memory_space<vmem>>, vector<1x128xf32>
    %c2_19 = arith.constant 2 : index
    %c0_20 = arith.constant 0 : index
    %21 = vector.load %arg7[%c2_19, %c0_20] : memref<8x128xf32, #tpu.memory_space<vmem>>, vector<1x128xf32>
    tpu.vector_store %arg7[%c2_19, %c0_20], %20 {strides = array<i32>} : memref<8x128xf32, #tpu.memory_space<vmem>>, vector<1x128xf32>,
    %22 = arith.index_cast %18 : i32 to index
    %c0_21 = arith.constant 0 : index
    %23 = vector.load %arg2[%22, %c0_21] : memref<16x16xf32, #tpu.memory_space<vmem>>, vector<1x16xf32>
    %c2_22 = arith.constant 2 : index
    %c0_23 = arith.constant 0 : index
    %24 = vector.load %arg8[%c2_22, %c0_23] : memref<8x16xf32, #tpu.memory_space<vmem>>, vector<1x16xf32>
    tpu.vector_store %arg8[%c2_22, %c0_23], %23 {strides = array<i32>} : memref<8x16xf32, #tpu.memory_space<vmem>>, vector<1x16xf32>,
    %c3 = arith.constant 3 : index
    %25 = memref.load %arg1[%c3] : memref<8xi32, #tpu.memory_space<smem>>
    %26 = arith.index_cast %25 : i32 to index
    %c0_24 = arith.constant 0 : index
    %27 = vector.load %arg6[%26, %c0_24] : memref<16x128xf32, #tpu.memory_space<vmem>>, vector<1x128xf32>
    %c3_25 = arith.constant 3 : index
    %c0_26 = arith.constant 0 : index
    %28 = vector.load %arg7[%c3_25, %c0_26] : memref<8x128xf32, #tpu.memory_space<vmem>>, vector<1x128xf32>
    tpu.vector_store %arg7[%c3_25, %c0_26], %27 {strides = array<i32>} : memref<8x128xf32, #tpu.memory_space<vmem>>, vector<1x128xf32>,
    %29 = arith.index_cast %25 : i32 to index
    %c0_27 = arith.constant 0 : index
    %30 = vector.load %arg2[%29, %c0_27] : memref<16x16xf32, #tpu.memory_space<vmem>>, vector<1x16xf32>
    %c3_28 = arith.constant 3 : index
    %c0_29 = arith.constant 0 : index
    %31 = vector.load %arg8[%c3_28, %c0_29] : memref<8x16xf32, #tpu.memory_space<vmem>>, vector<1x16xf32>
    tpu.vector_store %arg8[%c3_28, %c0_29], %30 {strides = array<i32>} : memref<8x16xf32, #tpu.memory_space<vmem>>, vector<1x16xf32>,
    %c4 = arith.constant 4 : index
    %32 = memref.load %arg1[%c4] : memref<8xi32, #tpu.memory_space<smem>>
    %33 = arith.index_cast %32 : i32 to index
    %c0_30 = arith.constant 0 : index
    %34 = vector.load %arg6[%33, %c0_30] : memref<16x128xf32, #tpu.memory_space<vmem>>, vector<1x128xf32>
    %c4_31 = arith.constant 4 : index
    %c0_32 = arith.constant 0 : index
    %35 = vector.load %arg7[%c4_31, %c0_32] : memref<8x128xf32, #tpu.memory_space<vmem>>, vector<1x128xf32>
    tpu.vector_store %arg7[%c4_31, %c0_32], %34 {strides = array<i32>} : memref<8x128xf32, #tpu.memory_space<vmem>>, vector<1x128xf32>,
    %36 = arith.index_cast %32 : i32 to index
    %c0_33 = arith.constant 0 : index
    %37 = vector.load %arg2[%36, %c0_33] : memref<16x16xf32, #tpu.memory_space<vmem>>, vector<1x16xf32>
    %c4_34 = arith.constant 4 : index
    %c0_35 = arith.constant 0 : index
    %38 = vector.load %arg8[%c4_34, %c0_35] : memref<8x16xf32, #tpu.memory_space<vmem>>, vector<1x16xf32>
    tpu.vector_store %arg8[%c4_34, %c0_35], %37 {strides = array<i32>} : memref<8x16xf32, #tpu.memory_space<vmem>>, vector<1x16xf32>,
    %c5 = arith.constant 5 : index
    %39 = memref.load %arg1[%c5] : memref<8xi32, #tpu.memory_space<smem>>
    %40 = arith.index_cast %39 : i32 to index
    %c0_36 = arith.constant 0 : index
    %41 = vector.load %arg6[%40, %c0_36] : memref<16x128xf32, #tpu.memory_space<vmem>>, vector<1x128xf32>
    %c5_37 = arith.constant 5 : index
    %c0_38 = arith.constant 0 : index
    %42 = vector.load %arg7[%c5_37, %c0_38] : memref<8x128xf32, #tpu.memory_space<vmem>>, vector<1x128xf32>
    tpu.vector_store %arg7[%c5_37, %c0_38], %41 {strides = array<i32>} : memref<8x128xf32, #tpu.memory_space<vmem>>, vector<1x128xf32>,
    %43 = arith.index_cast %39 : i32 to index
    %c0_39 = arith.constant 0 : index
    %44 = vector.load %arg2[%43, %c0_39] : memref<16x16xf32, #tpu.memory_space<vmem>>, vector<1x16xf32>
    %c5_40 = arith.constant 5 : index
    %c0_41 = arith.constant 0 : index
    %45 = vector.load %arg8[%c5_40, %c0_41] : memref<8x16xf32, #tpu.memory_space<vmem>>, vector<1x16xf32>
    tpu.vector_store %arg8[%c5_40, %c0_41], %44 {strides = array<i32>} : memref<8x16xf32, #tpu.memory_space<vmem>>, vector<1x16xf32>,
    %c6 = arith.constant 6 : index
    %46 = memref.load %arg1[%c6] : memref<8xi32, #tpu.memory_space<smem>>
    %47 = arith.index_cast %46 : i32 to index
    %c0_42 = arith.constant 0 : index
    %48 = vector.load %arg6[%47, %c0_42] : memref<16x128xf32, #tpu.memory_space<vmem>>, vector<1x128xf32>
    %c6_43 = arith.constant 6 : index
    %c0_44 = arith.constant 0 : index
    %49 = vector.load %arg7[%c6_43, %c0_44] : memref<8x128xf32, #tpu.memory_space<vmem>>, vector<1x128xf32>
    tpu.vector_store %arg7[%c6_43, %c0_44], %48 {strides = array<i32>} : memref<8x128xf32, #tpu.memory_space<vmem>>, vector<1x128xf32>,
    %50 = arith.index_cast %46 : i32 to index
    %c0_45 = arith.constant 0 : index
    %51 = vector.load %arg2[%50, %c0_45] : memref<16x16xf32, #tpu.memory_space<vmem>>, vector<1x16xf32>
    %c6_46 = arith.constant 6 : index
    %c0_47 = arith.constant 0 : index
    %52 = vector.load %arg8[%c6_46, %c0_47] : memref<8x16xf32, #tpu.memory_space<vmem>>, vector<1x16xf32>
    tpu.vector_store %arg8[%c6_46, %c0_47], %51 {strides = array<i32>} : memref<8x16xf32, #tpu.memory_space<vmem>>, vector<1x16xf32>,
    %c7 = arith.constant 7 : index
    %53 = memref.load %arg1[%c7] : memref<8xi32, #tpu.memory_space<smem>>
    %54 = arith.index_cast %53 : i32 to index
    %c0_48 = arith.constant 0 : index
    %55 = vector.load %arg6[%54, %c0_48] : memref<16x128xf32, #tpu.memory_space<vmem>>, vector<1x128xf32>
    %c7_49 = arith.constant 7 : index
    %c0_50 = arith.constant 0 : index
    %56 = vector.load %arg7[%c7_49, %c0_50] : memref<8x128xf32, #tpu.memory_space<vmem>>, vector<1x128xf32>
    tpu.vector_store %arg7[%c7_49, %c0_50], %55 {strides = array<i32>} : memref<8x128xf32, #tpu.memory_space<vmem>>, vector<1x128xf32>,
    %57 = arith.index_cast %53 : i32 to index
    %c0_51 = arith.constant 0 : index
    %58 = vector.load %arg2[%57, %c0_51] : memref<16x16xf32, #tpu.memory_space<vmem>>, vector<1x16xf32>
    %c7_52 = arith.constant 7 : index
    %c0_53 = arith.constant 0 : index
    %59 = vector.load %arg8[%c7_52, %c0_53] : memref<8x16xf32, #tpu.memory_space<vmem>>, vector<1x16xf32>
    tpu.vector_store %arg8[%c7_52, %c0_53], %58 {strides = array<i32>} : memref<8x16xf32, #tpu.memory_space<vmem>>, vector<1x16xf32>,
    %c0_54 = arith.constant 0 : index
    %c0_55 = arith.constant 0 : index
    %60 = vector.load %arg7[%c0_54, %c0_55] : memref<8x128xf32, #tpu.memory_space<vmem>>, vector<8x128xf32>
    %c0_56 = arith.constant 0 : index
    %c0_57 = arith.constant 0 : index
    %61 = vector.load %arg8[%c0_56, %c0_57] : memref<8x16xf32, #tpu.memory_space<vmem>>, vector<8x16xf32>
    %cst_58 = arith.constant dense<0.000000e+00> : vector<8x16xf32>
    %62 = tpu.matmul %60, %2, %cst_58 {dimension_numbers = #tpu.dot_dimension_numbers<[1], [1], [0], [0], [0, 0, 1, 0], [], []>} : vector<8x128xf32>, vector<16x128xf32>, vector<8x16xf32> -> vector<8x16xf32>
    %cst_59 = arith.constant 0.000000e+00 : f32
    %63 = vector.broadcast %cst_59 : f32 to vector<8x16xf32>
    %64 = arith.cmpf one, %61, %63 : vector<8x16xf32>
    %65 = arith.extui %64 : vector<8x16xi1> to vector<8x16xi32>
    %66 = arith.sitofp %65 : vector<8x16xi32> to vector<8x16xf32>
    %cst_60 = arith.constant dense<0.000000e+00> : vector<8x128xf32>
    %67 = tpu.matmul %66, %2, %cst_60 {dimension_numbers = #tpu.dot_dimension_numbers<[1], [0], [0], [1], [0, 0, 1, 1], [], []>} : vector<8x16xf32>, vector<16x128xf32>, vector<8x128xf32> -> vector<8x128xf32>
    %cst_61 = arith.constant dense<0.000000e+00> : vector<8xf32>
    %68 = vector.multi_reduction <add>, %66, %cst_61 [1] : vector<8x16xf32> to vector<8xf32>
    %69 = vector.shape_cast %68 : vector<8xf32> to vector<8x1xf32>
    %70 = arith.mulf %60, %67 : vector<8x128xf32>
    %cst_62 = arith.constant dense<0.000000e+00> : vector<8xf32>
    %71 = vector.multi_reduction <add>, %70, %cst_62 [1] : vector<8x128xf32> to vector<8xf32>
    %72 = vector.shape_cast %71 : vector<8xf32> to vector<8x1xf32>
    %73 = tpu.reciprocal %69 : vector<8x1xf32> -> vector<8x1xf32>
    %74 = arith.mulf %72, %73 : vector<8x1xf32>
    %75 = vector.broadcast %74 : vector<8x1xf32> to vector<8x16xf32>
    %76 = arith.addf %62, %75 : vector<8x16xf32>
    %cst_63 = arith.constant 0.000000e+00 : f32
    %77 = vector.broadcast %cst_63 : f32 to vector<8x16xf32>
    %78 = arith.cmpf ogt, %61, %77 : vector<8x16xf32>
    %cst_64 = arith.constant -9.000000e+15 : f32
    %79 = vector.broadcast %cst_64 : f32 to vector<8x16xf32>
    %80 = arith.select %78, %76, %79 : vector<8x16xi1>, vector<8x16xf32>
    %cst_65 = arith.constant dense<0xFF800000> : vector<8xf32>
    %81 = vector.multi_reduction <maximumf>, %80, %cst_65 [1] : vector<8x16xf32> to vector<8xf32>
    %82 = vector.shape_cast %81 : vector<8xf32> to vector<8x1xf32>
    %83 = vector.broadcast %82 : vector<8x1xf32> to vector<8x16xf32>
    %84 = arith.subf %80, %83 : vector<8x16xf32>
    %85 = math.exp %84 : vector<8x16xf32>
    %cst_66 = arith.constant dense<0.000000e+00> : vector<8xf32>
    %86 = vector.multi_reduction <add>, %85, %cst_66 [1] : vector<8x16xf32> to vector<8xf32>
    %87 = vector.shape_cast %86 : vector<8xf32> to vector<8x1xf32>
    %88 = tpu.reciprocal %87 : vector<8x1xf32> -> vector<8x1xf32>
    %89 = vector.broadcast %88 : vector<8x1xf32> to vector<8x16xf32>
    %90 = arith.mulf %85, %89 : vector<8x16xf32>
    %cst_67 = arith.constant dense<0.000000e+00> : vector<8x128xf32>
    %91 = tpu.matmul %90, %2, %cst_67 {dimension_numbers = #tpu.dot_dimension_numbers<[1], [0], [0], [1], [0, 0, 1, 1], [], []>} : vector<8x16xf32>, vector<16x128xf32>, vector<8x128xf32> -> vector<8x128xf32>
    %cst_68 = arith.constant 0.000000e+00 : f32
    %92 = vector.broadcast %cst_68 : f32 to vector<8x128xf32>
    %93 = arith.cmpf ogt, %91, %92 : vector<8x128xf32>
    %cst_69 = arith.constant 0.000000e+00 : f32
    %94 = vector.broadcast %cst_69 : f32 to vector<8x128xf32>
    %95 = arith.minimumf %91, %94 : vector<8x128xf32>
    %96 = math.exp %95 : vector<8x128xf32>
    %cst_70 = arith.constant 1.000000e+00 : f32
    %97 = vector.broadcast %cst_70 : f32 to vector<8x128xf32>
    %98 = arith.subf %96, %97 : vector<8x128xf32>
    %99 = arith.select %93, %91, %98 : vector<8x128xi1>, vector<8x128xf32>
    %100 = arith.mulf %99, %99 : vector<8x128xf32>
    %cst_71 = arith.constant dense<0.000000e+00> : vector<8xf32>
    %101 = vector.multi_reduction <add>, %100, %cst_71 [1] : vector<8x128xf32> to vector<8xf32>
    %102 = vector.shape_cast %101 : vector<8xf32> to vector<8x1xf32>
    %103 = math.sqrt %102 : vector<8x1xf32>
    %cst_72 = arith.constant 9.99999996E-13 : f32
    %104 = vector.broadcast %cst_72 : f32 to vector<8x1xf32>
    %105 = arith.maximumf %103, %104 : vector<8x1xf32>
    %106 = tpu.reciprocal %105 : vector<8x1xf32> -> vector<8x1xf32>
    %107 = vector.broadcast %106 : vector<8x1xf32> to vector<8x128xf32>
    %108 = arith.mulf %99, %107 : vector<8x128xf32>
    %c0_73 = arith.constant 0 : index
    %c0_74 = arith.constant 0 : index
    %109 = vector.load %arg5[%c0_73, %c0_74] : memref<8x128xf32, #tpu.memory_space<vmem>>, vector<8x128xf32>
    tpu.vector_store %arg5[%c0_73, %c0_74], %108 {strides = array<i32>} : memref<8x128xf32, #tpu.memory_space<vmem>>, vector<8x128xf32>,
    return
  }
  func.func @transform_0(%arg0: i32, %arg1: memref<8xi32, #tpu.memory_space<smem>>) -> (i32, i32) {
    %c0_i32 = arith.constant 0 : i32
    %c0_i32_0 = arith.constant 0 : i32
    %c0_i32_1 = arith.constant 0 : i32
    return %c0_i32, %c0_i32_0 : i32, i32
  }
  func.func @transform_1(%arg0: i32, %arg1: memref<8xi32, #tpu.memory_space<smem>>) -> (i32, i32) {
    %c0_i32 = arith.constant 0 : i32
    %c0_i32_0 = arith.constant 0 : i32
    %c0_i32_1 = arith.constant 0 : i32
    return %c0_i32, %c0_i32_0 : i32, i32
  }
  func.func @transform_2(%arg0: i32, %arg1: memref<8xi32, #tpu.memory_space<smem>>) -> (i32, i32) {
    %c0_i32 = arith.constant 0 : i32
    %c0_i32_0 = arith.constant 0 : i32
    %c0_i32_1 = arith.constant 0 : i32
    return %c0_i32, %c0_i32_0 : i32, i32
  }
  func.func @transform_3(%arg0: i32, %arg1: memref<8xi32, #tpu.memory_space<smem>>) -> (i32, i32) {
    %c0_i32 = arith.constant 0 : i32
    %c0_i32_0 = arith.constant 0 : i32
    %c0_i32_1 = arith.constant 0 : i32
    return %c0_i32, %c0_i32_0 : i32, i32
  }
}

</mosaic_0001>

<llo_original>
// kernel: tpu_custom_call.1
$region0: #{tpu_custom_call.1}
  #allocation0 [shape = 'u32[]', space=smem, size = 0x4, offset = 0x4, fixed_abs, tag = 'smem constant byte address 0x4 - core index']
  #allocation1 [shape = 'u32[72,128]{1,0:T(1,128)}', space=vmem, size = 0x9000, scoped, tag = 'internal scratch']
  #allocation2 [shape = 'f32[16,128]{1,0:T(8,128)}', space=vmem, size = 0x2000, scoped, tag = 'scratch operand']
  #allocation3 [shape = 'f32[8,128]{1,0:T(8,128)}', space=vmem, size = 0x1000, scoped, tag = 'scratch operand']
  #allocation4 [shape = 'f32[8,16]{1,0:T(8,128)}', space=vmem, size = 0x1000, scoped, tag = 'scratch operand']
  #allocation5 [shape = 's32[1]{0}', space=sflag, size = 0x4, scoped, tag = 'scoped memory for tpu_custom_call.1']
  #allocation6 [shape = 'u8[512]{0}', space=smem, size = 0x200, scoped, tag = 'prefetched SMEM operand 0']
  %s0 = inlined_call_operand.hbm [shape: s32[8], index: 0, kind: input, shape index: {}]
  %s1 = inlined_call_operand.hbm [shape: f32[16,16], index: 1, kind: input, shape index: {}]
  %s2 = inlined_call_operand.hbm [shape: f32[16,32], index: 2, kind: input, shape index: {}]
  %s3 = inlined_call_operand.hbm [shape: f32[32,128], index: 3, kind: input, shape index: {}]
  %s4 = inlined_call_operand.hbm [shape: f32[8,128], index: 4, kind: output, shape index: {}]
  %s5 = sld [smem:[#allocation0]]
  $region34: #{tpu_custom_call.1} parent=0
    _
  %s7 = ssub.s32 1, %s5
  %s8 = scalar_select 0, %s7, %s5
  %s10 = sshll.u32 %s0, 4
  %s11 = int_to_ptr.hbm [resolvable:$true] %s10
  %13 = dma.hbm_to_smem %s11, 16, [#allocation6], [#allocation5]
  %15 = dma.done [#allocation5], 16
  %16 = sfence
  $region1: #{tpu_custom_call.1} parent=0
    #allocation7 [shape = 'u8[8192]{0}', space=vmem, size = 0x2000, scoped, tag = 'input window, operand 1, single buffered']
    #allocation8 [shape = 's32[1]{0}', space=sflag, size = 0x4, scoped, tag = 'scoped memory for tpu_custom_call.1']
    #allocation9 [shape = 's32[1]{0}', space=sflag, size = 0x4, scoped, tag = 'scoped memory for tpu_custom_call.1']
    #allocation10 [shape = 'u8[8192]{0}', space=vmem, size = 0x2000, scoped, tag = 'input window, operand 2, single buffered']
    #allocation11 [shape = 's32[1]{0}', space=sflag, size = 0x4, scoped, tag = 'scoped memory for tpu_custom_call.1']
    #allocation12 [shape = 'u8[16384]{0}', space=vmem, size = 0x4000, scoped, tag = 'input window, operand 3, single buffered']
    #allocation13 [shape = 'u8[4096]{0}', space=vmem, size = 0x1000, scoped, tag = 'output window, operand 0, single buffered']
    %17 = vsyncpa [#allocation8], 0
    %18 = vsyncpa [#allocation11], 0
    %19 = vsyncpa [#allocation9], 0
    // Predicated region
    $region2: #{tpu_custom_call.1} parent=1 // pred_check
      _
    $region3: #{tpu_custom_call.1} parent=1 // pred_check_branch
      %21 = sbr.rel (0) target = $region5
    $region4: #{tpu_custom_call.1} parent=1 // pred_region
      %23 = vsyncadd [#allocation8], 0
      %s24 = sshll.u32 %s1, 4
      %s25 = int_to_ptr.hbm [resolvable:$true] %s24
      %s26 = sshll.u32 [#allocation7], 4
      %s27 = int_to_ptr.vmem [resolvable:$true] %s26
      %32 = dma.hbm_to_vmem [thread:$0]  %s25, 256, %s27, [#allocation8], 128, 128, 8
    $region5: #{tpu_custom_call.1} parent=1 // pred_fallthru
      _
    // Predicated region
    $region6: #{tpu_custom_call.1} parent=1 // pred_check
      _
    $region7: #{tpu_custom_call.1} parent=1 // pred_check_branch
      %34 = sbr.rel (0) target = $region9
    $region8: #{tpu_custom_call.1} parent=1 // pred_region
      %36 = vsyncadd [#allocation11], 0
      %s37 = sshll.u32 %s2, 4
      %s38 = int_to_ptr.hbm [resolvable:$true] %s37
      %s39 = sshll.u32 [#allocation10], 4
      %s40 = int_to_ptr.vmem [resolvable:$true] %s39
      %45 = dma.hbm_to_vmem [thread:$0]  %s38, 256, %s40, [#allocation11], 128, 128, 8
    $region9: #{tpu_custom_call.1} parent=1 // pred_fallthru
      _
    // Predicated region
    $region10: #{tpu_custom_call.1} parent=1 // pred_check
      _
    $region11: #{tpu_custom_call.1} parent=1 // pred_check_branch
      %47 = sbr.rel (0) target = $region13
    $region12: #{tpu_custom_call.1} parent=1 // pred_region
      %49 = vsyncadd [#allocation11], 0
      %s50 = sshll.u32 %s3, 4
      %s51 = int_to_ptr.hbm [resolvable:$true] %s50
      %s52 = sshll.u32 [#allocation12], 4
      %s53 = int_to_ptr.vmem [resolvable:$true] %s52
      %58 = dma.hbm_to_vmem [thread:$0]  %s51, 512, %s53, [#allocation11], 128, 128, 8
    $region13: #{tpu_custom_call.1} parent=1 // pred_fallthru
      _
    // Predicated region
    $region14: #{tpu_custom_call.1} parent=1 // pred_check
      _
    $region15: #{tpu_custom_call.1} parent=1 // pred_check_branch
      %60 = sbr.rel (0) target = $region17
    $region16: #{tpu_custom_call.1} parent=1 // pred_region
      %62 = dma.done [#allocation8], 256
    $region17: #{tpu_custom_call.1} parent=1 // pred_fallthru
      _
    // Predicated region
    $region18: #{tpu_custom_call.1} parent=1 // pred_check
      _
    $region19: #{tpu_custom_call.1} parent=1 // pred_check_branch
      %64 = sbr.rel (0) target = $region21
    $region20: #{tpu_custom_call.1} parent=1 // pred_region
      %66 = dma.done [#allocation11], 256
    $region21: #{tpu_custom_call.1} parent=1 // pred_fallthru
      _
    // Predicated region
    $region22: #{tpu_custom_call.1} parent=1 // pred_check
      _
    $region23: #{tpu_custom_call.1} parent=1 // pred_check_branch
      %68 = sbr.rel (0) target = $region25
    $region24: #{tpu_custom_call.1} parent=1 // pred_region
      %70 = dma.done [#allocation11], 512
    $region25: #{tpu_custom_call.1} parent=1 // pred_fallthru
      _
    %v71 = vld [vmem:[#allocation10] sm:$0xff]
    %v72 = vld [vmem:[#allocation10 + $0x8] sm:$0xff]
    %v73 = vld [vmem:[#allocation12] sm:$0xff]
    %v74 = vld [vmem:[#allocation12 + $0x8] sm:$0xff]
    %v75 = vld [vmem:[#allocation12 + $0x10] sm:$0xff]
    %v76 = vld [vmem:[#allocation12 + $0x18] sm:$0xff]
    %vm77 = vcmask 261120
    %v79 = vsel %vm77, %v71, 0
    %v82 = vsel %vm77, %v72, 0
    %84 = vmatpush.msra.mxu0 0.0
    %85 = vmatpush.msra.mxu0 0.0
    %86 = vmatpush.msra.mxu0 0.0
    %87 = vmatpush.msra.mxu0 0.0
    %88 = vmatpush.msra.mxu0 0.0
    %89 = vmatpush.msra.mxu0 0.0
    %90 = vmatpush.msra.mxu0 0.0
    %91 = vmatpush.msra.mxu0 0.0
    %92 = vmatpush.msra.mxu0 0.0
    %93 = vmatpush.msra.mxu0 0.0
    %94 = vmatpush.msra.mxu0 0.0
    %95 = vmatpush.msra.mxu0 0.0
    %96 = vmatpush.msra.mxu0 %v76
    %97 = vmatpush.msra.mxu0 %v75
    %98 = vmatpush.msra.mxu0 %v74
    %99 = vmatpush.msra.mxu0 %v73
    %100 = vmatmul.f32.gmra.mxu0 %v79
    %v101 = vpop.f32.mrf.mxu0
    %v102 = vadd.f32 0.0, %v101
    %103 = vmatmul.f32.gmra.mxu0 %v82
    %v104 = vpop.f32.mrf.mxu0
    %v105 = vadd.f32 0.0, %v104
    %106 = vdwg.mxu0
    %107 = vst [vmem:[#allocation2] sm:$0xff] %v102
    %108 = vst [vmem:[#allocation2 + $0x8] sm:$0xff] %v105
    %s109 = sld [smem:[#allocation6]]
    %s110 = scalar_lea.vmem [#allocation2], %s109
    %v111 = vld [vmem:[%s110] sm:$0x1]
    %112 = vst [vmem:[#allocation3] sm:$0x1] %v111
    %s113 = scalar_lea.vmem [#allocation7], %s109
    %v114 = vld [vmem:[%s113] sm:$0x1]
    %vm115 = vcmask 122880
    %116 = vst.msk [vmem:[#allocation4] sm:$0x1] %vm115, %v114
    %s117 = sld [smem:[#allocation6 + $0x1]]
    %s118 = scalar_lea.vmem [#allocation2], %s117
    %v119 = vld [vmem:[%s118] sm:$0x1]
    %120 = vst [vmem:[#allocation3 + $0x1] sm:$0x1] %v119
    %s121 = scalar_lea.vmem [#allocation7], %s117
    %v122 = vld [vmem:[%s121] sm:$0x1]
    %123 = vst.msk [vmem:[#allocation4 + $0x1] sm:$0x1] %vm115, %v122
    %s124 = sld [smem:[#allocation6 + $0x2]]
    %s125 = scalar_lea.vmem [#allocation2], %s124
    %v126 = vld [vmem:[%s125] sm:$0x1]
    %127 = vst [vmem:[#allocation3 + $0x2] sm:$0x1] %v126
    %s128 = scalar_lea.vmem [#allocation7], %s124
    %v129 = vld [vmem:[%s128] sm:$0x1]
    %130 = vst.msk [vmem:[#allocation4 + $0x2] sm:$0x1] %vm115, %v129
    %s131 = sld [smem:[#allocation6 + $0x3]]
    %s132 = scalar_lea.vmem [#allocation2], %s131
    %v133 = vld [vmem:[%s132] sm:$0x1]
    %134 = vst [vmem:[#allocation3 + $0x3] sm:$0x1] %v133
    %s135 = scalar_lea.vmem [#allocation7], %s131
    %v136 = vld [vmem:[%s135] sm:$0x1]
    %137 = vst.msk [vmem:[#allocation4 + $0x3] sm:$0x1] %vm115, %v136
    %s138 = sld [smem:[#allocation6 + $0x4]]
    %s139 = scalar_lea.vmem [#allocation2], %s138
    %v140 = vld [vmem:[%s139] sm:$0x1]
    %141 = vst [vmem:[#allocation3 + $0x4] sm:$0x1] %v140
    %s142 = scalar_lea.vmem [#allocation7], %s138
    %v143 = vld [vmem:[%s142] sm:$0x1]
    %144 = vst.msk [vmem:[#allocation4 + $0x4] sm:$0x1] %vm115, %v143
    %s145 = sld [smem:[#allocation6 + $0x5]]
    %s146 = scalar_lea.vmem [#allocation2], %s145
    %v147 = vld [vmem:[%s146] sm:$0x1]
    %148 = vst [vmem:[#allocation3 + $0x5] sm:$0x1] %v147
    %s149 = scalar_lea.vmem [#allocation7], %s145
    %v150 = vld [vmem:[%s149] sm:$0x1]
    %151 = vst.msk [vmem:[#allocation4 + $0x5] sm:$0x1] %vm115, %v150
    %s152 = sld [smem:[#allocation6 + $0x6]]
    %s153 = scalar_lea.vmem [#allocation2], %s152
    %v154 = vld [vmem:[%s153] sm:$0x1]
    %155 = vst [vmem:[#allocation3 + $0x6] sm:$0x1] %v154
    %s156 = scalar_lea.vmem [#allocation7], %s152
    %v157 = vld [vmem:[%s156] sm:$0x1]
    %158 = vst.msk [vmem:[#allocation4 + $0x6] sm:$0x1] %vm115, %v157
    %s159 = sld [smem:[#allocation6 + $0x7]]
    %s160 = scalar_lea.vmem [#allocation2], %s159
    %v161 = vld [vmem:[%s160] sm:$0x1]
    %162 = vst [vmem:[#allocation3 + $0x7] sm:$0x1] %v161
    %s163 = scalar_lea.vmem [#allocation7], %s159
    %v164 = vld [vmem:[%s163] sm:$0x1]
    %165 = vst.msk [vmem:[#allocation4 + $0x7] sm:$0x1] %vm115, %v164
    %v166 = vld [vmem:[#allocation3] sm:$0xff]
    %v167 = vld [vmem:[#allocation4] sm:$0xff]
    %vm168 = vcmp.ne.f32.partialorder %v167, 0.0
    %v169 = vsel %vm168, 1, 0
    %v170 = vcvt.s32.f32 %v169
    %vm171 = vcmask 130048
    %v173 = vsel %vm171, %v170, 0
    %175 = vmatpush.msra.mxu0 0.0
    %176 = vmatpush.msra.mxu0 0.0
    %177 = vmatpush.msra.mxu0 0.0
    %178 = vmatpush.msra.mxu0 0.0
    %179 = vmatpush.msra.mxu0 0.0
    %180 = vmatpush.msra.mxu0 0.0
    %181 = vmatpush.msra.mxu0 0.0
    %182 = vmatpush.msra.mxu0 0.0
    %183 = vmatpush.msra.mxu0 0.0
    %184 = vmatpush.msra.mxu0 0.0
    %185 = vmatpush.msra.mxu0 0.0
    %186 = vmatpush.msra.mxu0 0.0
    %187 = vmatpush.msra.mxu0 0.0
    %188 = vmatpush.msra.mxu0 0.0
    %189 = vmatpush.msra.mxu0 %v105
    %190 = vmatpush.msra.mxu0 %v102
    %191 = vmatmul.f32.gmra.mxu0 %v173
    %v192 = vpop.f32.mrf.mxu0
    %v193 = vadd.f32 0.0, %v192
    %194 = vdwg.mxu0
    %v195 = vsel %vm171, %v170, 0.0
    %196 = vadd.xlane.f32.xlu0 %v195
    %v197 = vpop.xlane.xlu0 %196
    %v198 = vmul.f32 %v166, %v193
    %199 = vadd.xlane.f32.xlu0 %v198
    %v200 = vpop.xlane.xlu0 %199
    %v201 = vrcp.pop %v197
    %v202 = vmul.f32 %v197, %v201
    %v203 = vsub.f32 1.0, %v202
    %v204 = vmul.f32 %v201, %v203
    %v205 = vadd.f32 %v201, %v204
    %vm206 = vweird.f32 %v197
    %vm207 = vweird.f32 %v201
    %vm208 = vmor %vm206, %vm207
    %v209 = vsel %vm208, %v201, %v205
    %v210 = vand.u32 2147483647, %v197
    %vm211 = vcmp.eq.f32.partialorder %v210, 8.507059e+37
    %v212 = vand.u32 %v197, 2147483648
    %v213 = vor.u32 1.1754944e-38, %v212
    %v214 = vsel %vm211, %v213, %v209
    %v215 = vmul.f32 %v200, %v214
    %216 = vmatpush.xpose.msra.mxu0 0.0
    %217 = vmatpush.xpose.msra.mxu0 0.0
    %218 = vmatpush.xpose.msra.mxu0 0.0
    %219 = vmatpush.xpose.msra.mxu0 0.0
    %220 = vmatpush.xpose.msra.mxu0 0.0
    %221 = vmatpush.xpose.msra.mxu0 0.0
    %222 = vmatpush.xpose.msra.mxu0 0.0
    %223 = vmatpush.xpose.msra.mxu0 0.0
    %224 = vmatpush.xpose.msra.mxu0 0.0
    %225 = vmatpush.xpose.msra.mxu0 0.0
    %226 = vmatpush.xpose.msra.mxu0 0.0
    %227 = vmatpush.xpose.msra.mxu0 0.0
    %228 = vmatpush.xpose.msra.mxu0 0.0
    %229 = vmatpush.xpose.msra.mxu0 0.0
    %230 = vmatpush.xpose.msra.mxu0 %v105
    %231 = vmatpush.xpose.msra.mxu0 %v102
    %232 = vmatmul.f32.gmra.mxu0 %v166
    %v233 = vpop.f32.mrf.mxu0
    %v234 = vadd.f32 %v215, %v233
    %235 = vdwg.mxu0
    %vm236 = vcmp.gt.f32.partialorder %v167, 0.0
    %v237 = vsel %vm236, %v234, -9e+15
    %v238 = vsel %vm171, %v237, -inf
    %239 = vmax.xlane.f32.xlu0 %v238
    %v240 = vpop.xlane.xlu0 %239
    %v241 = vsub.f32 %v237, %v240
    %v242 = vmul.f32 %v241, 1.442695
    %v243 = vpow.pop %v242
    %v244 = vsel %vm171, %v243, 0.0
    %245 = vadd.xlane.f32.xlu0 %v244
    %v246 = vpop.xlane.xlu0 %245
    %v247 = vrcp.pop %v246
    %v248 = vmul.f32 %v246, %v247
    %v249 = vsub.f32 1.0, %v248
    %v250 = vmul.f32 %v247, %v249
    %v251 = vadd.f32 %v247, %v250
    %vm252 = vweird.f32 %v246
    %vm253 = vweird.f32 %v247
    %vm254 = vmor %vm252, %vm253
    %v255 = vsel %vm254, %v247, %v251
    %v256 = vand.u32 2147483647, %v246
    %vm257 = vcmp.eq.f32.partialorder %v256, 8.507059e+37
    %v258 = vand.u32 %v246, 2147483648
    %v259 = vor.u32 1.1754944e-38, %v258
    %v260 = vsel %vm257, %v259, %v255
    %v261 = vmul.f32 %v243, %v260
    %v263 = vsel %vm171, %v261, 0
    %265 = vmatpush.msra.mxu0 0.0
    %266 = vmatpush.msra.mxu0 0.0
    %267 = vmatpush.msra.mxu0 0.0
    %268 = vmatpush.msra.mxu0 0.0
    %269 = vmatpush.msra.mxu0 0.0
    %270 = vmatpush.msra.mxu0 0.0
    %271 = vmatpush.msra.mxu0 0.0
    %272 = vmatpush.msra.mxu0 0.0
    %273 = vmatpush.msra.mxu0 0.0
    %274 = vmatpush.msra.mxu0 0.0
    %275 = vmatpush.msra.mxu0 0.0
    %276 = vmatpush.msra.mxu0 0.0
    %277 = vmatpush.msra.mxu0 0.0
    %278 = vmatpush.msra.mxu0 0.0
    %279 = vmatpush.msra.mxu0 %v105
    %280 = vmatpush.msra.mxu0 %v102
    %281 = vmatmul.f32.gmra.mxu0 %v263
    %v282 = vpop.f32.mrf.mxu0
    %v283 = vadd.f32 0.0, %v282
    %284 = vdwg.mxu0
    %vm285 = vcmp.gt.f32.partialorder %v283, 0.0
    %v286 = vmin.f32 %v283, 0.0
    %v287 = vmul.f32 %v286, 1.442695
    %v288 = vpow.pop %v287
    %v289 = vsub.f32 %v288, 1.0
    %v290 = vsel %vm285, %v283, %v289
    %v291 = vmul.f32 %v290, %v290
    %292 = vadd.xlane.f32.xlu0 %v291
    %v293 = vpop.xlane.xlu0 %292
    %v294 = vrsqrt.pop %v293
    %v295 = vmul.f32 %v294, %v293
    %v296 = vmul.f32 %v295, %v294
    %v297 = vmul.f32 0.5, %v296
    %v298 = vsub.f32 1.5, %v297
    %v299 = vmul.f32 %v294, %v298
    %v300 = vmul.f32 %v293, %v299
    %vm301 = vcmp.eq.f32.partialorder %v293, inf
    %v302 = vsel %vm301, %v293, %v300
    %vm303 = vcmp.eq.f32.partialorder %v293, 0.0
    %v304 = vand.u32 %v293, 2147483648
    %v305 = vsel %vm303, %v304, %v302
    %v306 = vmax.f32 %v305, 1e-12
    %v307 = vrcp.pop %v306
    %v308 = vmul.f32 %v306, %v307
    %v309 = vsub.f32 1.0, %v308
    %v310 = vmul.f32 %v307, %v309
    %v311 = vadd.f32 %v307, %v310
    %vm312 = vweird.f32 %v306
    %vm313 = vweird.f32 %v307
    %vm314 = vmor %vm312, %vm313
    %v315 = vsel %vm314, %v307, %v311
    %v316 = vand.u32 2147483647, %v306
    %vm317 = vcmp.eq.f32.partialorder %v316, 8.507059e+37
    %v318 = vand.u32 %v306, 2147483648
    %v319 = vor.u32 1.1754944e-38, %v318
    %v320 = vsel %vm317, %v319, %v315
    %v321 = vmul.f32 %v290, %v320
    %322 = vst [vmem:[#allocation13] sm:$0xff] %v321
    // Predicated region
    $region26: #{tpu_custom_call.1} parent=1 // pred_check
      _
    $region27: #{tpu_custom_call.1} parent=1 // pred_check_branch
      %324 = sbr.rel (0) target = $region29
    $region28: #{tpu_custom_call.1} parent=1 // pred_region
      %326 = vsyncadd [#allocation9], 0
      %s328 = sshll.u32 [#allocation13], 4
      %s329 = int_to_ptr.vmem [resolvable:$true] %s328
      %s330 = sshll.u32 %s4, 4
      %s331 = int_to_ptr.hbm [resolvable:$true] %s330
      %333 = dma.vmem_to_hbm [thread:$0]  %s329, 128, %s331, [#allocation9]
    $region29: #{tpu_custom_call.1} parent=1 // pred_fallthru
      _
    // Predicated region
    $region30: #{tpu_custom_call.1} parent=1 // pred_check
      _
    $region31: #{tpu_custom_call.1} parent=1 // pred_check_branch
      %335 = sbr.rel (0) target = $region33
    $region32: #{tpu_custom_call.1} parent=1 // pred_region
      %337 = dma.done [#allocation9], 128
    $region33: #{tpu_custom_call.1} parent=1 // pred_fallthru
      _
    %338 = vsyncpa [#allocation8], 1
    %339 = vsyncpa [#allocation11], 1
    %340 = vsyncpa [#allocation9], 1

</llo_original>
